<compile_context>
chip_gen: v5e
topology: v5e:2x2
jax: 0.10.0
libtpu: 0.0.40
codegen_flags: <defaults>
</compile_context>

<pallas_src>
import functools

import jax
import jax.numpy as jnp
from jax.experimental import pallas as pl
from jax.experimental.pallas import tpu as pltpu

_LANES = 128
_SUBLANES = 8
_MIN_PALLAS_BATCH = 2048      # below this, plain JAX beats kernel launch+DMA
_DEFAULT_MAX_TILE_ROWS = 4096  # 4096*128*4B*(1 in + 2 out)*2 buf ~= 12.6 MiB


def _cdiv(a, b):
    return -(-a // b)


def _round_up(a, m):
    return _cdiv(a, m) * m


def _plan_tiles(rows, max_tile_rows):
    """Pick (tile, rows_pad): tile % 8 == 0, rows_pad % tile == 0, >= 2 steps.

    Aims for >= 4 (even) grid steps with the biggest blocks that fit the
    per-generation scoped-VMEM defaults (v5e 16 MiB is the binding one), and
    for zero padding whenever `rows` already divides nicely.
    """
    max_tile = max(_SUBLANES, (max_tile_rows // _SUBLANES) * _SUBLANES)
    steps = max(4, _cdiv(rows, max_tile))
    steps += steps % 2                              # even -> v7x TC balance
    tile = min(max_tile, _round_up(_cdiv(rows, steps), _SUBLANES))
    rows_pad = _round_up(rows, tile)                # don't add pure-pad blocks
    return tile, rows_pad


def _disc_kernel(p_ref, x_ref, o_ref):
    # p_ref : SMEM (8,) f32 packed params:
    #         [W1[0,0], W1[0,1], b1[0], W2[0,0], W2[1,0], b2[0], b2[1], 0]
    # x_ref : VMEM (TILE, 128) f32      lane-dense batch slab
    # o_ref : VMEM (2, TILE, 128) f32   merged output (feature-major slabs)
    w1x = p_ref[0]
    w1y = p_ref[1]
    b1 = p_ref[2]
    w20 = p_ref[3]
    w21 = p_ref[4]
    b20 = p_ref[5]
    b21 = p_ref[6]

    x = x_ref[...]                                  # (TILE, 128)
    # fc1 applied to cat([x, x*x], dim=1) without materializing the concat:
    h = x * w1x + (x * x) * w1y + b1                # (TILE, 128)
    # sigm1: single hidden feature -> each output feature is a scalar affine
    # of h; both stores come straight from the same h vreg.
    o_ref[0] = h * w20 + b20
    o_ref[1] = h * w21 + b21


def _reference_forward(x, w1, b1, w2, b2):
    # Pure-JAX mirror of the PyTorch module (also the tiny-batch fast path).
    xf = x.astype(jnp.float32)
    z = jnp.concatenate([xf, xf * xf], axis=1)      # (B, 2)
    h = z @ w1.T + b1                               # (B, 1)
    return h @ w2.T + b2                            # (B, 2)


@functools.partial(jax.jit, static_argnames=("max_tile_rows", "use_pallas"))
def discriminator_simple_forward(x, w1, b1, w2, b2, *,
                                 max_tile_rows=_DEFAULT_MAX_TILE_ROWS,
                                 use_pallas=None):
    """x: (B,1); w1: (1,2); b1: (1,); w2: (2,1); b2: (2,). Returns (B,2)."""
    B = x.shape[0]
    if use_pallas is None:
        use_pallas = B >= _MIN_PALLAS_BATCH
    if not use_pallas:
        return _reference_forward(x, w1, b1, w2, b2)

    xf = x.reshape(-1).astype(jnp.float32)          # (B,) — free view

    rows = _cdiv(B, _LANES)
    tile, rows_pad = _plan_tiles(rows, max_tile_rows)
    total = rows_pad * _LANES
    if total != B:
        # Only emitted for ragged / unaligned batches; fuses into one pass
        # under jit.  Aligned batches hit the zero-copy reshape below.
        xf = jnp.pad(xf, (0, total - B))
    x2d = xf.reshape(rows_pad, _LANES)              # lane-dense slab

    # Pack the 7 scalar parameters into one SMEM array (padded to 8).
    params = jnp.concatenate([
        w1.reshape(-1).astype(jnp.float32),         # W1[0,0], W1[0,1]
        b1.reshape(-1).astype(jnp.float32),         # b1[0]
        w2.reshape(-1).astype(jnp.float32),         # W2[0,0], W2[1,0]
        b2.reshape(-1).astype(jnp.float32),         # b2[0], b2[1]
        jnp.zeros((1,), jnp.float32),               # pad
    ])                                              # (8,)

    grid = (rows_pad // tile,)                      # always >= 2 steps on the
                                                    # auto-dispatched path
    out = pl.pallas_call(
        _disc_kernel,
        out_shape=jax.ShapeDtypeStruct((2, rows_pad, _LANES), jnp.float32),
        grid=grid,
        in_specs=[
            pl.BlockSpec(memory_space=pltpu.SMEM),           # params
            pl.BlockSpec((tile, _LANES), lambda i: (i, 0)),  # x slab
        ],
        out_specs=pl.BlockSpec((2, tile, _LANES), lambda i: (0, i, 0)),
        compiler_params=pltpu.CompilerParams(
            dimension_semantics=("parallel",)),     # v7x: 2 TCs split batch
    )(params, x2d)

    # (2, rows_pad, 128) -> (2, total) is a free view; the slice + transpose
    # to (B, 2) fuses into a single XLA epilogue under jit.
    return out.reshape(2, total)[:, :B].T           # (B, 2)


if __name__ == "__main__":
    key = jax.random.PRNGKey(0)
    k_x, k_w1, k_b1, k_w2, k_b2, k_x2 = jax.random.split(key, 6)

    # Deterministic parameter init (PyTorch nn.Linear shapes, uniform bounds).
    w1 = jax.random.uniform(k_w1, (1, 2), jnp.float32, -0.7071, 0.7071)  # Linear(2,1).weight
    b1 = jax.random.uniform(k_b1, (1,),   jnp.float32, -0.7071, 0.7071)  # Linear(2,1).bias
    w2 = jax.random.uniform(k_w2, (2, 1), jnp.float32, -1.0, 1.0)        # Linear(1,2).weight
    b2 = jax.random.uniform(k_b2, (2,),   jnp.float32, -1.0, 1.0)        # Linear(1,2).bias

    # Small case (B=8): force the Pallas path (auto-dispatch would choose the
    # pure-JAX fallback at this size).
    B = 8
    x = jax.random.normal(k_x, (B, 1), dtype=jnp.float32)
    out = jax.block_until_ready(
        discriminator_simple_forward(x, w1, b1, w2, b2, use_pallas=True))
    ref = _reference_forward(x, w1, b1, w2, b2)
    assert out.shape == (B, 2)
    assert jnp.allclose(out, ref, atol=1e-5, rtol=1e-5), (out, ref)

    # Ragged larger case: auto-dispatch takes the kernel path, multi-step grid
    # (rows=313 -> tile=80, grid=(4,)), batch not a multiple of 128.
    B2 = 40000
    x2 = jax.random.normal(k_x2, (B2, 1), dtype=jnp.float32)
    out2 = jax.block_until_ready(discriminator_simple_forward(x2, w1, b1, w2, b2))
    ref2 = _reference_forward(x2, w1, b1, w2, b2)
    assert out2.shape == (B2, 2)
    assert jnp.allclose(out2, ref2, atol=1e-5, rtol=1e-5)

    # Tiny-batch auto path (pure-JAX fallback) still matches.
    out3 = jax.block_until_ready(discriminator_simple_forward(x, w1, b1, w2, b2))
    assert jnp.allclose(out3, ref, atol=1e-5, rtol=1e-5)

    print("KERNEL_OK")
</pallas_src>

<mosaic_0001>
module attributes {stable_mosaic.version = 11 : i64} {
  func.func @_disc_kernel(%arg0: i32, %arg1: memref<8xf32, #tpu.memory_space<smem>>, %arg2: memref<8x128xf32, #tpu.memory_space<vmem>>, %arg3: memref<2x8x128xf32, #tpu.memory_space<vmem>>) attributes {dimension_semantics = [#tpu.dimension_semantics<parallel>], iteration_bounds = array<i64: 1>, scalar_prefetch = 0 : i64, scratch_operands = 0 : i64, tpu.core_type = #tpu.core_type<tc>, window_params = [{transform_indices = @transform_0, window_bounds = array<i64: 8>}, {transform_indices = @transform_1, window_bounds = array<i64: 8, 128>}, {transform_indices = @transform_2, window_bounds = array<i64: 2, 8, 128>}]} {
    %c0 = arith.constant 0 : index
    %0 = memref.load %arg1[%c0] : memref<8xf32, #tpu.memory_space<smem>>
    %c1 = arith.constant 1 : index
    %1 = memref.load %arg1[%c1] : memref<8xf32, #tpu.memory_space<smem>>
    %c2 = arith.constant 2 : index
    %2 = memref.load %arg1[%c2] : memref<8xf32, #tpu.memory_space<smem>>
    %c3 = arith.constant 3 : index
    %3 = memref.load %arg1[%c3] : memref<8xf32, #tpu.memory_space<smem>>
    %c4 = arith.constant 4 : index
    %4 = memref.load %arg1[%c4] : memref<8xf32, #tpu.memory_space<smem>>
    %c5 = arith.constant 5 : index
    %5 = memref.load %arg1[%c5] : memref<8xf32, #tpu.memory_space<smem>>
    %c6 = arith.constant 6 : index
    %6 = memref.load %arg1[%c6] : memref<8xf32, #tpu.memory_space<smem>>
    %c0_0 = arith.constant 0 : index
    %c0_1 = arith.constant 0 : index
    %7 = vector.load %arg2[%c0_0, %c0_1] : memref<8x128xf32, #tpu.memory_space<vmem>>, vector<8x128xf32>
    %8 = vector.broadcast %0 : f32 to vector<8x128xf32>
    %9 = arith.mulf %7, %8 : vector<8x128xf32>
    %10 = arith.mulf %7, %7 : vector<8x128xf32>
    %11 = vector.broadcast %1 : f32 to vector<8x128xf32>
    %12 = arith.mulf %10, %11 : vector<8x128xf32>
    %13 = arith.addf %9, %12 : vector<8x128xf32>
    %14 = vector.broadcast %2 : f32 to vector<8x128xf32>
    %15 = arith.addf %13, %14 : vector<8x128xf32>
    %16 = vector.broadcast %3 : f32 to vector<8x128xf32>
    %17 = arith.mulf %15, %16 : vector<8x128xf32>
    %18 = vector.broadcast %5 : f32 to vector<8x128xf32>
    %19 = arith.addf %17, %18 : vector<8x128xf32>
    %c0_2 = arith.constant 0 : index
    %c0_3 = arith.constant 0 : index
    %c0_4 = arith.constant 0 : index
    %20 = vector.load %arg3[%c0_2, %c0_3, %c0_4] : memref<2x8x128xf32, #tpu.memory_space<vmem>>, vector<1x8x128xf32>
    %21 = vector.shape_cast %20 : vector<1x8x128xf32> to vector<8x128xf32>
    %22 = vector.shape_cast %19 : vector<8x128xf32> to vector<1x8x128xf32>
    tpu.vector_store %arg3[%c0_2, %c0_3, %c0_4], %22 {strides = array<i32>} : memref<2x8x128xf32, #tpu.memory_space<vmem>>, vector<1x8x128xf32>,
    %23 = vector.broadcast %4 : f32 to vector<8x128xf32>
    %24 = arith.mulf %15, %23 : vector<8x128xf32>
    %25 = vector.broadcast %6 : f32 to vector<8x128xf32>
    %26 = arith.addf %24, %25 : vector<8x128xf32>
    %c1_5 = arith.constant 1 : index
    %c0_6 = arith.constant 0 : index
    %c0_7 = arith.constant 0 : index
    %27 = vector.load %arg3[%c1_5, %c0_6, %c0_7] : memref<2x8x128xf32, #tpu.memory_space<vmem>>, vector<1x8x128xf32>
    %28 = vector.shape_cast %27 : vector<1x8x128xf32> to vector<8x128xf32>
    %29 = vector.shape_cast %26 : vector<8x128xf32> to vector<1x8x128xf32>
    tpu.vector_store %arg3[%c1_5, %c0_6, %c0_7], %29 {strides = array<i32>} : memref<2x8x128xf32, #tpu.memory_space<vmem>>, vector<1x8x128xf32>,
    return
  }
  func.func @transform_0(%arg0: i32) -> i32 {
    %c0_i32 = arith.constant 0 : i32
    %c0_i32_0 = arith.constant 0 : i32
    return %c0_i32 : i32
  }
  func.func @transform_1(%arg0: i32) -> (i32, i32) {
    %c0_i32 = arith.constant 0 : i32
    %c0_i32_0 = arith.constant 0 : i32
    return %arg0, %c0_i32 : i32, i32
  }
  func.func @transform_2(%arg0: i32) -> (i32, i32, i32) {
    %c0_i32 = arith.constant 0 : i32
    %c0_i32_0 = arith.constant 0 : i32
    %c0_i32_1 = arith.constant 0 : i32
    return %c0_i32, %arg0, %c0_i32_0 : i32, i32, i32
  }
}

</mosaic_0001>

<llo_original>
// kernel: discriminator_simple_forward.1
$region0: #{discriminator_simple_forward.1}
  #allocation0 [shape = 'u32[]', space=smem, size = 0x4, offset = 0x4, fixed_abs, tag = 'smem constant byte address 0x4 - core index']
  #allocation1 [shape = 'u32[72,128]{1,0:T(1,128)}', space=vmem, size = 0x9000, scoped, tag = 'internal scratch']
  %s0 = inlined_call_operand.vmem [shape: f32[8], index: 0, kind: input, shape index: {}]
  %s1 = inlined_call_operand.vmem [shape: f32[8,128], index: 1, kind: input, shape index: {}]
  %s2 = inlined_call_operand.vmem [shape: f32[2,8,128], index: 2, kind: output, shape index: {}]
  %s3 = sld [smem:[#allocation0]]
  $region22: #{discriminator_simple_forward.1} parent=0
    _
  %s5 = ssub.s32 1, %s3
  %s6 = scalar_select 0, %s5, %s3
  $region1: #{discriminator_simple_forward.1} parent=0
    #allocation2 [shape = 'u8[512]{0}', space=smem, size = 0x200, scoped, tag = 'input window, operand 0, single buffered']
    #allocation3 [shape = 's32[1]{0}', space=sflag, size = 0x4, scoped, tag = 'scoped memory for discriminator_simple_forward.1']
    %7 = vsyncpa [#allocation3], 0
    // Predicated region
    $region2: #{discriminator_simple_forward.1} parent=1 // pred_check
      _
    $region3: #{discriminator_simple_forward.1} parent=1 // pred_check_branch
      %9 = sbr.rel (0) target = $region5
    $region4: #{discriminator_simple_forward.1} parent=1 // pred_region
      %11 = vsyncadd [#allocation3], 0
      %s13 = sshll.u32 %s0, 4
      %s14 = int_to_ptr.vmem [resolvable:$true] %s13
      %16 = dma.vmem_to_smem %s14, 16, [#allocation2], [#allocation3]
    $region5: #{discriminator_simple_forward.1} parent=1 // pred_fallthru
      _
    // Predicated region
    $region6: #{discriminator_simple_forward.1} parent=1 // pred_check
      _
    $region7: #{discriminator_simple_forward.1} parent=1 // pred_check_branch
      %18 = sbr.rel (0) target = $region9
    $region8: #{discriminator_simple_forward.1} parent=1 // pred_region
      _
    $region9: #{discriminator_simple_forward.1} parent=1 // pred_fallthru
      _
    // Predicated region
    $region10: #{discriminator_simple_forward.1} parent=1 // pred_check
      _
    $region11: #{discriminator_simple_forward.1} parent=1 // pred_check_branch
      %20 = sbr.rel (0) target = $region13
    $region12: #{discriminator_simple_forward.1} parent=1 // pred_region
      %22 = dma.done [#allocation3], 16
    $region13: #{discriminator_simple_forward.1} parent=1 // pred_fallthru
      _
    %23 = sfence
    %s24 = sld [smem:[#allocation2]]
    %s25 = sld [smem:[#allocation2 + $0x1]]
    %s26 = sld [smem:[#allocation2 + $0x2]]
    %s27 = sld [smem:[#allocation2 + $0x3]]
    %s28 = sld [smem:[#allocation2 + $0x4]]
    %s29 = sld [smem:[#allocation2 + $0x5]]
    %s30 = sld [smem:[#allocation2 + $0x6]]
    %v31 = vld [vmem:[%s1] sm:$0xff]
    %v32 = vstv %s24
    %v33 = vmul.f32 %v31, %v32
    %v34 = vmul.f32 %v31, %v31
    %v35 = vstv %s25
    %v36 = vmul.f32 %v34, %v35
    %v37 = vadd.f32 %v33, %v36
    %v38 = vstv %s26
    %v39 = vadd.f32 %v37, %v38
    %v40 = vstv %s27
    %v41 = vmul.f32 %v39, %v40
    %v42 = vstv %s29
    %v43 = vadd.f32 %v41, %v42
    %44 = vst [vmem:[%s2] sm:$0xff] %v43
    %v45 = vstv %s28
    %v46 = vmul.f32 %v39, %v45
    %v47 = vstv %s30
    %v48 = vadd.f32 %v46, %v47
    %s49 = scalar_lea.vmem %s2, 8
    %50 = vst [vmem:[%s49] sm:$0xff] %v48
    // Predicated region
    $region14: #{discriminator_simple_forward.1} parent=1 // pred_check
      _
    $region15: #{discriminator_simple_forward.1} parent=1 // pred_check_branch
      %52 = sbr.rel (0) target = $region17
    $region16: #{discriminator_simple_forward.1} parent=1 // pred_region
      _
    $region17: #{discriminator_simple_forward.1} parent=1 // pred_fallthru
      _
    // Predicated region
    $region18: #{discriminator_simple_forward.1} parent=1 // pred_check
      _
    $region19: #{discriminator_simple_forward.1} parent=1 // pred_check_branch
      %54 = sbr.rel (0) target = $region21
    $region20: #{discriminator_simple_forward.1} parent=1 // pred_region
      _
    $region21: #{discriminator_simple_forward.1} parent=1 // pred_fallthru
      _
    %55 = vsyncpa [#allocation3], 1

</llo_original>
